<compile_context>
chip_gen: v6e
topology: v6e:2x2x1
jax: 0.10.0
libtpu: 0.0.40
codegen_flags: <defaults>
</compile_context>

<pallas_src>
import functools

import jax
import jax.numpy as jnp
from jax.experimental import pallas as pl
from jax.experimental.pallas import tpu as pltpu

SUBLANE = 16   # bf16 sublane packing granularity (also valid for f32)
LANE = 128     # lane width


def _round_up(x, m):
    return ((x + m - 1) // m) * m


def _pick_tile(dim, target, gran, pref_gran=None):
    """Largest tile <= target that divides `dim` and is a multiple of `gran`.

    If `pref_gran` is given (e.g. 256 for the v6e/v7x MXU), a pref_gran-aligned
    divisor is preferred when one exists; otherwise fall back to `gran`.
    `dim` is always a multiple of `gran` by construction, so this never fails.
    """
    target = min(target, dim)
    grans = [g for g in (pref_gran, gran) if g is not None and g <= dim]
    for g in grans:
        t = (target // g) * g
        while t >= g:
            if dim % t == 0:
                return t
            t -= g
    return gran


def dense_linear_kernel(x_ref, w_ref, b_ref, o_ref, acc_ref):
    # x_ref: (tm, tk) bf16, w_ref: (tk, tn) bf16, b_ref: (1, tn) f32,
    # o_ref: (tm, tn) out dtype, acc_ref: (tm, tn) f32 resident accumulator.
    k = pl.program_id(2)

    @pl.when(k == 0)
    def _():
        acc_ref[...] = jnp.zeros_like(acc_ref)

    # Contraction on last dim of x / first dim of w feeds the MXU directly
    # (no in-kernel transpose); bf16 operands, f32 accumulation.
    acc_ref[...] += jnp.dot(x_ref[...], w_ref[...],
                            preferred_element_type=jnp.float32)

    @pl.when(k == pl.num_programs(2) - 1)
    def _():
        o_ref[...] = (acc_ref[...] + b_ref[...]).astype(o_ref.dtype)


def pack_dense_linear_params(weight, bias, compute_dtype=jnp.bfloat16):
    """One-time packing: W (N, K) -> W^T padded to (Kp, Np) in compute_dtype,
    bias padded to (1, Np) in f32.  Do this at init, not per forward call."""
    N, K = weight.shape
    Kp = _round_up(K, LANE)   # lane dim of x tile; also covers sublane gran of W^T
    Np = _round_up(N, LANE)
    wt = weight.T.astype(compute_dtype)
    wt_p = jnp.pad(wt, ((0, Kp - K), (0, Np - N)))
    if bias is None:
        b_p = jnp.zeros((1, Np), jnp.float32)
    else:
        b_p = jnp.pad(bias.astype(jnp.float32), (0, Np - N)).reshape(1, Np)
    return wt_p, b_p


@functools.partial(jax.jit, static_argnames=("n_out", "tm", "tn", "tk"))
def dense_linear_packed(x, wt_p, b_p, *, n_out, tm=512, tn=1024, tk=512):
    """y = x @ W^T + b with a pre-packed (Kp, Np) weight (see pack_dense_linear_params)."""
    M, K = x.shape
    Kp, Np = wt_p.shape
    assert K <= Kp and n_out <= Np

    # Pad x only to hardware granularity (16 sublanes, 128 lanes for the K lane dim).
    Mp = _round_up(M, SUBLANE)
    x_c = x.astype(wt_p.dtype)
    if Mp != M or Kp != K:
        x_c = jnp.pad(x_c, ((0, Mp - M), (0, Kp - K)))

    # Divisor-safe tiles (no padding to tile multiples -> no wasted MXU/HBM work).
    tm = _pick_tile(Mp, tm, SUBLANE)
    tn = _pick_tile(Np, tn, LANE, pref_gran=256)   # fill the 256-wide MXU on v6e/v7x
    tk = _pick_tile(Kp, tk, LANE, pref_gran=256)

    # v7x megacore: keep >= 2 steps along the parallel (M, N) axes so both
    # TensorCores get work; shrink tm first (batch), then tn.
    while (Mp // tm) * (Np // tn) < 2:
        if tm > SUBLANE:
            tm = _pick_tile(Mp, max(tm // 2, SUBLANE), SUBLANE)
        elif tn > LANE:
            tn = _pick_tile(Np, max(tn // 2, LANE), LANE)
        else:
            break

    grid = (Mp // tm, Np // tn, Kp // tk)

    out = pl.pallas_call(
        dense_linear_kernel,
        out_shape=jax.ShapeDtypeStruct((Mp, Np), x.dtype),
        grid=grid,
        in_specs=[
            pl.BlockSpec((tm, tk), lambda i, j, k: (i, k)),   # x tile (bf16)
            pl.BlockSpec((tk, tn), lambda i, j, k: (k, j)),   # packed W^T tile (bf16)
            pl.BlockSpec((1, tn), lambda i, j, k: (0, j)),    # bias slice (f32)
        ],
        out_specs=pl.BlockSpec((tm, tn), lambda i, j, k: (i, j)),
        scratch_shapes=[pltpu.VMEM((tm, tn), jnp.float32)],
        compiler_params=pltpu.CompilerParams(
            dimension_semantics=("parallel", "parallel", "arbitrary"),
            # Explicit limit: raises v5e's 16 MiB default, matches v6e/v7x
            # scoped defaults, stays well inside v7x's 64 MiB physical VMEM.
            vmem_limit_bytes=32 * 1024 * 1024),
    )(x_c, wt_p, b_p)

    return out[:M, :n_out]


def dense_linear(x, weight, bias, *, compute_dtype=jnp.bfloat16,
                 force_pallas=False, **tile_kwargs):
    """Convenience: y = x @ weight.T + bias.

    Small problems bypass Pallas (XLA's fused dot is strictly faster there and
    avoids pad/transpose copies).  For repeated use, pack the weight once with
    pack_dense_linear_params() and call dense_linear_packed() directly.
    """
    M, K = x.shape
    N = weight.shape[0]
    if not force_pallas and M * N * K < (1 << 22):
        y = jnp.dot(x, weight.T)
        return y + bias[None, :] if bias is not None else y
    wt_p, b_p = pack_dense_linear_params(weight, bias, compute_dtype)
    return dense_linear_packed(x, wt_p, b_p, n_out=N, **tile_kwargs)


def init_dense_linear_params(key, in_features, out_features, dtype=jnp.float32):
    """Deterministic re-implementation of DenseLinear.reset_parameters()."""
    stdv = 1.0 / (float(in_features) ** 0.5)
    k_w, k_b = jax.random.split(key)
    # Orthogonal init with gain=stdv (rows orthonormal when out <= in).
    a = jax.random.normal(k_w, (in_features, out_features), jnp.float32)
    q, _ = jnp.linalg.qr(a)                 # orthonormal columns
    weight = (stdv * q.T).astype(dtype)     # (out_features, in_features)
    bias = jax.random.uniform(
        k_b, (out_features,), dtype, minval=-stdv, maxval=stdv)
    return weight, bias


if __name__ == "__main__":
    key = jax.random.PRNGKey(0)
    k_x, k_p, k_x2, k_p2 = jax.random.split(key, 4)

    # --- Small shape consistent with the module (dense layer on flat features).
    batch, in_features, out_features = 8, 32, 16
    x = jax.random.normal(k_x, (batch, in_features), jnp.float32)
    weight, bias = init_dense_linear_params(k_p, in_features, out_features)

    # Packed path (recommended: transpose/pad/cast hoisted out of the per-call path).
    wt_p, b_p = pack_dense_linear_params(weight, bias)
    y = jax.block_until_ready(dense_linear_packed(x, wt_p, b_p, n_out=out_features))
    y_ref = jnp.dot(x.astype(jnp.bfloat16), weight.T.astype(jnp.bfloat16),
                    preferred_element_type=jnp.float32) + bias[None, :]
    assert y.shape == (batch, out_features)
    assert jnp.allclose(y.astype(jnp.float32), y_ref, atol=1e-2, rtol=1e-2)

    # Convenience wrapper exercises the small-problem fast path (exact f32).
    y_fast = jax.block_until_ready(dense_linear(x, weight, bias))
    y_ref32 = x @ weight.T + bias[None, :]
    assert jnp.allclose(y_fast, y_ref32, atol=1e-5, rtol=1e-5)

    # --- Medium, non-tile-aligned shape: exercises hardware-granularity padding,
    # divisor-safe tile picking, multi-step K accumulation and >=2 parallel steps.
    M2, K2, N2 = 640, 1152, 512
    x2 = jax.random.normal(k_x2, (M2, K2), jnp.float32)
    weight2, bias2 = init_dense_linear_params(k_p2, K2, N2)
    wt2_p, b2_p = pack_dense_linear_params(weight2, bias2)
    y2 = jax.block_until_ready(dense_linear_packed(x2, wt2_p, b2_p, n_out=N2))
    y2_ref = jnp.dot(x2.astype(jnp.bfloat16), weight2.T.astype(jnp.bfloat16),
                     preferred_element_type=jnp.float32) + bias2[None, :]
    assert y2.shape == (M2, N2)
    assert jnp.allclose(y2.astype(jnp.float32), y2_ref, atol=1e-2, rtol=1e-2)

    # TODO(synk): forward() in the base class raises NotImplementedError; the
    # canonical subclass semantics (x @ W^T + b) are implemented here.
    # project_weights() is a training-time weight projection, not part of forward.
    print("KERNEL_OK")
</pallas_src>

<mosaic_0001>
module attributes {stable_mosaic.version = 11 : i64} {
  func.func @dense_linear_kernel(%arg0: i32, %arg1: i32, %arg2: i32, %arg3: memref<16x128xbf16, #tpu.memory_space<vmem>>, %arg4: memref<128x128xbf16, #tpu.memory_space<vmem>>, %arg5: memref<1x128xf32, #tpu.memory_space<vmem>>, %arg6: memref<16x128xf32, #tpu.memory_space<vmem>>, %arg7: memref<16x128xf32, #tpu.memory_space<vmem>>) attributes {dimension_semantics = [#tpu.dimension_semantics<parallel>, #tpu.dimension_semantics<parallel>, #tpu.dimension_semantics<arbitrary>], iteration_bounds = array<i64: 1, 1, 1>, scalar_prefetch = 0 : i64, scratch_operands = 1 : i64, tpu.core_type = #tpu.core_type<tc>, window_params = [{transform_indices = @transform_0, window_bounds = array<i64: 16, 128>}, {transform_indices = @transform_1, window_bounds = array<i64: 128, 128>}, {transform_indices = @transform_2, window_bounds = array<i64: 1, 128>}, {transform_indices = @transform_3, window_bounds = array<i64: 16, 128>}]} {
    %c0_i32 = arith.constant 0 : i32
    %0 = arith.cmpi eq, %arg2, %c0_i32 : i32
    %1 = arith.extui %0 : i1 to i32
    %c0_i32_0 = arith.constant 0 : i32
    %2 = arith.cmpi ne, %1, %c0_i32_0 : i32
    scf.if %2 {
      %cst_10 = arith.constant 0.000000e+00 : f32
      %12 = vector.broadcast %cst_10 : f32 to vector<16x128xf32>
      %c0_11 = arith.constant 0 : index
      %c0_12 = arith.constant 0 : index
      %13 = vector.load %arg7[%c0_11, %c0_12] : memref<16x128xf32, #tpu.memory_space<vmem>>, vector<16x128xf32>
      tpu.vector_store %arg7[%c0_11, %c0_12], %12 {strides = array<i32>} : memref<16x128xf32, #tpu.memory_space<vmem>>, vector<16x128xf32>,
    } else {
    }
    %c0 = arith.constant 0 : index
    %c0_1 = arith.constant 0 : index
    %3 = vector.load %arg7[%c0, %c0_1] : memref<16x128xf32, #tpu.memory_space<vmem>>, vector<16x128xf32>
    %c0_2 = arith.constant 0 : index
    %c0_3 = arith.constant 0 : index
    %4 = vector.load %arg3[%c0_2, %c0_3] : memref<16x128xbf16, #tpu.memory_space<vmem>>, vector<16x128xbf16>
    %c0_4 = arith.constant 0 : index
    %c0_5 = arith.constant 0 : index
    %5 = vector.load %arg4[%c0_4, %c0_5] : memref<128x128xbf16, #tpu.memory_space<vmem>>, vector<128x128xbf16>
    %cst = arith.constant dense<0.000000e+00> : vector<16x128xf32>
    %6 = tpu.matmul %4, %5, %cst {dimension_numbers = #tpu.dot_dimension_numbers<[1], [0], [0], [1], [0, 0, 1, 1], [], []>} : vector<16x128xbf16>, vector<128x128xbf16>, vector<16x128xf32> -> vector<16x128xf32>
    %7 = arith.addf %3, %6 : vector<16x128xf32>
    %c0_6 = arith.constant 0 : index
    %c0_7 = arith.constant 0 : index
    %8 = vector.load %arg7[%c0_6, %c0_7] : memref<16x128xf32, #tpu.memory_space<vmem>>, vector<16x128xf32>
    tpu.vector_store %arg7[%c0_6, %c0_7], %7 {strides = array<i32>} : memref<16x128xf32, #tpu.memory_space<vmem>>, vector<16x128xf32>,
    %c0_i32_8 = arith.constant 0 : i32
    %9 = arith.cmpi eq, %arg2, %c0_i32_8 : i32
    %10 = arith.extui %9 : i1 to i32
    %c0_i32_9 = arith.constant 0 : i32
    %11 = arith.cmpi ne, %10, %c0_i32_9 : i32
    scf.if %11 {
      %c0_10 = arith.constant 0 : index
      %c0_11 = arith.constant 0 : index
      %12 = vector.load %arg7[%c0_10, %c0_11] : memref<16x128xf32, #tpu.memory_space<vmem>>, vector<16x128xf32>
      %c0_12 = arith.constant 0 : index
      %c0_13 = arith.constant 0 : index
      %13 = vector.load %arg5[%c0_12, %c0_13] : memref<1x128xf32, #tpu.memory_space<vmem>>, vector<1x128xf32>
      %14 = vector.broadcast %13 : vector<1x128xf32> to vector<16x128xf32>
      %15 = arith.addf %12, %14 : vector<16x128xf32>
      %c0_14 = arith.constant 0 : index
      %c0_15 = arith.constant 0 : index
      %16 = vector.load %arg6[%c0_14, %c0_15] : memref<16x128xf32, #tpu.memory_space<vmem>>, vector<16x128xf32>
      tpu.vector_store %arg6[%c0_14, %c0_15], %15 {strides = array<i32>} : memref<16x128xf32, #tpu.memory_space<vmem>>, vector<16x128xf32>,
    } else {
    }
    return
  }
  func.func @transform_0(%arg0: i32, %arg1: i32, %arg2: i32) -> (i32, i32) {
    %c0_i32 = arith.constant 0 : i32
    return %arg0, %arg2 : i32, i32
  }
  func.func @transform_1(%arg0: i32, %arg1: i32, %arg2: i32) -> (i32, i32) {
    %c0_i32 = arith.constant 0 : i32
    return %arg2, %arg1 : i32, i32
  }
  func.func @transform_2(%arg0: i32, %arg1: i32, %arg2: i32) -> (i32, i32) {
    %c0_i32 = arith.constant 0 : i32
    %c0_i32_0 = arith.constant 0 : i32
    return %c0_i32, %arg1 : i32, i32
  }
  func.func @transform_3(%arg0: i32, %arg1: i32, %arg2: i32) -> (i32, i32) {
    %c0_i32 = arith.constant 0 : i32
    return %arg0, %arg1 : i32, i32
  }
}

</mosaic_0001>

<llo_original>
// kernel: dense_linear_packed.1
$region0: #{dense_linear_packed.1}
  #allocation0 [shape = 'u32[]', space=smem, size = 0x4, offset = 0x4, fixed_abs, tag = 'smem constant byte address 0x4 - core index']
  #allocation1 [shape = 'u32[144,128]{1,0:T(1,128)}', space=vmem, size = 0x12000, scoped, tag = 'internal scratch']
  #allocation2 [shape = 'f32[16,128]{1,0:T(8,128)}', space=vmem, size = 0x2000, scoped, tag = 'scratch operand']
  %s0 = inlined_call_operand.vmem [shape: bf16[16,128], index: 0, kind: input, shape index: {}]
  %s1 = inlined_call_operand.hbm [shape: bf16[128,128], index: 1, kind: input, shape index: {}]
  %s2 = inlined_call_operand.vmem [shape: f32[1,128], index: 2, kind: input, shape index: {}]
  %s3 = inlined_call_operand.vmem [shape: f32[16,128], index: 3, kind: output, shape index: {}]
  %s4 = sld [smem:[#allocation0]]
  $region34: #{dense_linear_packed.1} parent=0
    _
  %s6 = ssub.s32 1, %s4
  %s7 = scalar_select 0, %s6, %s4
  $region1: #{dense_linear_packed.1} parent=0
    #allocation3 [shape = 'u8[32768]{0}', space=vmem, size = 0x8000, scoped, tag = 'input window, operand 1, single buffered']
    #allocation4 [shape = 's32[1]{0}', space=sflag, size = 0x4, scoped, tag = 'scoped memory for dense_linear_packed.1']
    %8 = vsyncpa [#allocation4], 0
    // Predicated region
    $region2: #{dense_linear_packed.1} parent=1 // pred_check
      _
    $region3: #{dense_linear_packed.1} parent=1 // pred_check_branch
      %10 = sbr.rel (0) target = $region5
    $region4: #{dense_linear_packed.1} parent=1 // pred_region
      _
    $region5: #{dense_linear_packed.1} parent=1 // pred_fallthru
      _
    // Predicated region
    $region6: #{dense_linear_packed.1} parent=1 // pred_check
      _
    $region7: #{dense_linear_packed.1} parent=1 // pred_check_branch
      %12 = sbr.rel (0) target = $region9
    $region8: #{dense_linear_packed.1} parent=1 // pred_region
      %s14 = ssub.s32 1024, 1024
      %15 = vsyncadd [#allocation4], %s14
      %s16 = sshll.u32 [#allocation3], 4
      %s17 = int_to_ptr.vmem [resolvable:$true] %s16
      %22 = dma.hbm_to_vmem [thread:$0]  %s1, 1024, %s17, [#allocation4], 64, 64, 4
    $region9: #{dense_linear_packed.1} parent=1 // pred_fallthru
      _
    // Predicated region
    $region10: #{dense_linear_packed.1} parent=1 // pred_check
      _
    $region11: #{dense_linear_packed.1} parent=1 // pred_check_branch
      %24 = sbr.rel (0) target = $region13
    $region12: #{dense_linear_packed.1} parent=1 // pred_region
      _
    $region13: #{dense_linear_packed.1} parent=1 // pred_fallthru
      _
    // Predicated region
    $region14: #{dense_linear_packed.1} parent=1 // pred_check
      _
    $region15: #{dense_linear_packed.1} parent=1 // pred_check_branch
      %26 = sbr.rel (0) target = $region17
    $region16: #{dense_linear_packed.1} parent=1 // pred_region
      %27 = dma.done [#allocation4], 1024
    $region17: #{dense_linear_packed.1} parent=1 // pred_fallthru
      _
    %p29 = scmp.eq.s32.totalorder 0, 0
    // Predicated region
    $region18: #{dense_linear_packed.1} parent=1 // pred_check
      %p30 = pneg %p29
    $region19: #{dense_linear_packed.1} parent=1 // pred_check_branch
      %32 = sbr.rel (%p30) target = $region21
    $region20: #{dense_linear_packed.1} parent=1 // pred_region
      %33 = vst [vmem:[#allocation2] sm:$0xff] 0.0
      %34 = vst [vmem:[#allocation2 + $0x8] sm:$0xff] 0.0
    $region21: #{dense_linear_packed.1} parent=1 // pred_fallthru
      _
    %v35 = vld [vmem:[#allocation2] sm:$0xff]
    %v36 = vld [vmem:[#allocation2 + $0x8] sm:$0xff]
    %v37 = vld [vmem:[%s0] sm:$0xf]
    %v38 = vld [vmem:[%s0 + $0x4] sm:$0xf]
    %v39 = vld [vmem:[#allocation3] sm:$0xf]
    %v40 = vld [vmem:[#allocation3 + $0x4] sm:$0xf]
    %v41 = vld [vmem:[#allocation3 + $0x8] sm:$0xf]
    %v42 = vld [vmem:[#allocation3 + $0xc] sm:$0xf]
    %v43 = vld [vmem:[#allocation3 + $0x10] sm:$0xf]
    %v44 = vld [vmem:[#allocation3 + $0x14] sm:$0xf]
    %v45 = vld [vmem:[#allocation3 + $0x18] sm:$0xf]
    %v46 = vld [vmem:[#allocation3 + $0x1c] sm:$0xf]
    %v47 = vld [vmem:[#allocation3 + $0x20] sm:$0xf]
    %v48 = vld [vmem:[#allocation3 + $0x24] sm:$0xf]
    %v49 = vld [vmem:[#allocation3 + $0x28] sm:$0xf]
    %v50 = vld [vmem:[#allocation3 + $0x2c] sm:$0xf]
    %v51 = vld [vmem:[#allocation3 + $0x30] sm:$0xf]
    %v52 = vld [vmem:[#allocation3 + $0x34] sm:$0xf]
    %v53 = vld [vmem:[#allocation3 + $0x38] sm:$0xf]
    %v54 = vld [vmem:[#allocation3 + $0x3c] sm:$0xf]
    %v57 = vunpack.c.l.b16 %v37
    %v58 = vunpack.c.l.b16 %v38
    %v59 = vpack.c.b16 %v58, %v57
    %v77 = vunpack.c.l.b16 %v39
    %v78 = vunpack.c.l.b16 %v40
    %v79 = vunpack.c.l.b16 %v41
    %v80 = vunpack.c.l.b16 %v42
    %v81 = vunpack.c.l.b16 %v43
    %v82 = vunpack.c.l.b16 %v44
    %v83 = vunpack.c.l.b16 %v45
    %v84 = vunpack.c.l.b16 %v46
    %v85 = vunpack.c.l.b16 %v47
    %v86 = vunpack.c.l.b16 %v48
    %v87 = vunpack.c.l.b16 %v49
    %v88 = vunpack.c.l.b16 %v50
    %v89 = vunpack.c.l.b16 %v51
    %v90 = vunpack.c.l.b16 %v52
    %v91 = vunpack.c.l.b16 %v53
    %v92 = vunpack.c.l.b16 %v54
    %v93 = vpack.c.b16 %v78, %v77
    %v94 = vpack.c.b16 %v80, %v79
    %v95 = vpack.c.b16 %v82, %v81
    %v96 = vpack.c.b16 %v84, %v83
    %v97 = vpack.c.b16 %v86, %v85
    %v98 = vpack.c.b16 %v88, %v87
    %v99 = vpack.c.b16 %v90, %v89
    %v100 = vpack.c.b16 %v92, %v91
    %109 = vmatprep.subr.bf16.mxu0 0
    %110 = vmatpush1.bf16.msra.mxu0 %v100
    %111 = vmatprep.subr.bf16.mxu0 0
    %112 = vmatpush1.bf16.msra.mxu0 %v99
    %113 = vmatprep.subr.bf16.mxu0 0
    %114 = vmatpush1.bf16.msra.mxu0 %v98
    %115 = vmatprep.subr.bf16.mxu0 0
    %116 = vmatpush1.bf16.msra.mxu0 %v97
    %117 = vmatprep.subr.bf16.mxu0 0
    %118 = vmatpush1.bf16.msra.mxu0 %v96
    %119 = vmatprep.subr.bf16.mxu0 0
    %120 = vmatpush1.bf16.msra.mxu0 %v95
    %121 = vmatprep.subr.bf16.mxu0 0
    %122 = vmatpush1.bf16.msra.mxu0 %v94
    %123 = vmatprep.subr.bf16.mxu0 0
    %124 = vmatpush1.bf16.msra.mxu0 %v93
    %125 = vmatprep.subr.bf16.mxu0 0
    %126 = vmatpush2.bf16.msra.mxu0 0
    %127 = vmatprep.subr.bf16.mxu0 0
    %128 = vmatpush2.bf16.msra.mxu0 0
    %129 = vmatprep.subr.bf16.mxu0 0
    %130 = vmatpush2.bf16.msra.mxu0 0
    %131 = vmatprep.subr.bf16.mxu0 0
    %132 = vmatpush2.bf16.msra.mxu0 0
    %133 = vmatprep.subr.bf16.mxu0 0
    %134 = vmatpush2.bf16.msra.mxu0 0
    %135 = vmatprep.subr.bf16.mxu0 0
    %136 = vmatpush2.bf16.msra.mxu0 0
    %137 = vmatprep.subr.bf16.mxu0 0
    %138 = vmatpush2.bf16.msra.mxu0 0
    %139 = vmatprep.subr.bf16.mxu0 0
    %140 = vmatpush2.bf16.msra.mxu0 0
    %141 = vmatprep.mubr.bf16.mxu0 0
    %142 = vmatmul.mubr.bf16.gmra.mxu0 %v59
    %v143 = vpop.f32.mrf.mxu0
    %v144 = vadd.f32 0.0, %v143
    %v145 = vpop.f32.mrf.mxu0
    %v146 = vpop.f32.mrf.mxu0
    %v147 = vadd.f32 0.0, %v146
    %v148 = vpop.f32.mrf.mxu0
    %149 = vdwg.mxu0
    %v150 = vadd.f32 %v35, %v144
    %v151 = vadd.f32 %v36, %v147
    %152 = vst [vmem:[#allocation2] sm:$0xff] %v150
    %153 = vst [vmem:[#allocation2 + $0x8] sm:$0xff] %v151
    // Predicated region
    $region22: #{dense_linear_packed.1} parent=1 // pred_check
      %p154 = pneg %p29
    $region23: #{dense_linear_packed.1} parent=1 // pred_check_branch
      %156 = sbr.rel (%p154) target = $region25
    $region24: #{dense_linear_packed.1} parent=1 // pred_region
      %v157 = vld [vmem:[#allocation2] sm:$0xff]
      %v158 = vld [vmem:[#allocation2 + $0x8] sm:$0xff]
      %v159 = vld [vmem:[%s2] sm:$0x1]
      %v161 = vlaneseq
      %v162 = vshrl.u32 %v161, 7
      %v163 = vsub.s32 0, %v162
      %v164 = vrot.slane %v159, %v163
      %v166 = vadd.f32 %v157, %v164
      %v167 = vadd.f32 %v158, %v164
      %168 = vst [vmem:[%s3] sm:$0xff] %v166
      %169 = vst [vmem:[%s3 + $0x8] sm:$0xff] %v167
    $region25: #{dense_linear_packed.1} parent=1 // pred_fallthru
      _
    // Predicated region
    $region26: #{dense_linear_packed.1} parent=1 // pred_check
      _
    $region27: #{dense_linear_packed.1} parent=1 // pred_check_branch
      %171 = sbr.rel (0) target = $region29
    $region28: #{dense_linear_packed.1} parent=1 // pred_region
      _
    $region29: #{dense_linear_packed.1} parent=1 // pred_fallthru
      _
    // Predicated region
    $region30: #{dense_linear_packed.1} parent=1 // pred_check
      _
    $region31: #{dense_linear_packed.1} parent=1 // pred_check_branch
      %173 = sbr.rel (0) target = $region33
    $region32: #{dense_linear_packed.1} parent=1 // pred_region
      _
    $region33: #{dense_linear_packed.1} parent=1 // pred_fallthru
      _
    %174 = vsyncpa [#allocation4], 1

</llo_original>
